<compile_context>
chip_gen: v5e
topology: v5e:2x2
jax: 0.10.0
libtpu: 0.0.40
codegen_flags: <defaults>
</compile_context>

<pallas_src>
import functools

import jax
import jax.numpy as jnp
from jax.experimental import pallas as pl
from jax.experimental.pallas import tpu as pltpu

_VMEM = pltpu.MemorySpace.VMEM
CP = 128  # every activation / weight channel dim is padded to 128 lanes


def _vmem_specs(k):
    return [pl.BlockSpec(memory_space=_VMEM) for _ in range(k)]


def _cp(grid_dims=0):
    kw = dict(vmem_limit_bytes=32 * 1024 * 1024)
    if grid_dims:
        kw["dimension_semantics"] = ("parallel",) * grid_dims
    return pltpu.CompilerParams(**kw)


def _round_up(x, m):
    return ((x + m - 1) // m) * m


def _pad_axis(a, axis, new_size):
    pad = [(0, 0)] * a.ndim
    pad[axis] = (0, new_size - a.shape[axis])
    return jnp.pad(a, pad)


# ------------------------------------------------------------------
# Pallas kernels
# ------------------------------------------------------------------

def _stem_kernel(p_ref, w_ref, b_ref, o_ref):
    # conv (as matmul over K-padded patches) + folded BN + ReLU, bf16 x bf16
    # MXU operands, f32 accumulation / epilogue, lane-dense 128-wide output.
    acc = jnp.dot(p_ref[...], w_ref[...], preferred_element_type=jnp.float32)
    o_ref[...] = jnp.maximum(acc + b_ref[...], 0.0)


def _maxpool_kernel(ph_ref, o_ref, *, n, po, pw):
    # 3x3 stride-2 maxpool from a phase-decomposed (-inf padded) input; the
    # output is written directly in zero-padded row-flattened layout so the
    # next conv kernel can consume it with no re-padding.
    m = None
    for di in range(3):
        for dj in range(3):
            p0 = ((di % 2) * 2 + (dj % 2)) * n
            t = ph_ref[p0:p0 + n, di // 2:di // 2 + po, dj // 2:dj // 2 + pw, :]
            m = t if m is None else jnp.maximum(m, t)
    hp, wp = po + 2, pw + 2
    o_ref[...] = jnp.zeros_like(o_ref)
    for i in range(n):
        for r in range(po):
            dst = i * hp * wp + (r + 1) * wp + 1
            o_ref[dst:dst + pw, :] = m[i, r]


def _conv3_shift(src_ref, w_ref, wp, length):
    # 3x3 stride-1 conv on a zero-padded, row-flattened [n*hp*wp, CP] ref:
    # nine shifted row-slabs, each multiplied by a per-tap [CP, CP] weight.
    acc = None
    for di in range(3):
        for dj in range(3):
            off = di * wp + dj
            xs = src_ref[off:off + length, :].astype(jnp.bfloat16)
            d = jnp.dot(xs, w_ref[di * 3 + dj],
                        preferred_element_type=jnp.float32)
            acc = d if acc is None else acc + d
    return acc


def _block_s1_kernel(x_ref, w1_ref, b1_ref, w2_ref, b2_ref, mask_ref,
                     o_ref, mid_ref, *, n, hp, wp):
    # Whole BasicBlock (stride 1, identity shortcut) in one kernel.
    base = wp + 1
    length = n * hp * wp - 2 * base
    # conv1 + folded BN1 + ReLU, zeroed at padding positions
    h = jnp.maximum(_conv3_shift(x_ref, w1_ref, wp, length) + b1_ref[...], 0.0)
    h = h * mask_ref[...]
    mid_ref[...] = jnp.zeros_like(mid_ref)
    mid_ref[base:base + length, :] = h
    # conv2 + folded BN2 + identity residual + ReLU
    acc2 = _conv3_shift(mid_ref, w2_ref, wp, length)
    y = jnp.maximum(acc2 + b2_ref[...] + x_ref[base:base + length, :], 0.0)
    y = y * mask_ref[...]
    o_ref[...] = jnp.zeros_like(o_ref)
    o_ref[base:base + length, :] = y


def _block_down_kernel(t_ref, w1_ref, b1_ref, w2_ref, b2_ref, wsc_ref, bsc_ref,
                       *rest, n, oh, ow, with_head):
    # Whole downsampling BasicBlock (stride 2, 1x1-conv projection shortcut)
    # in one kernel; optionally fuses the global-avg-pool + Linear head.
    if with_head:
        wfc_ref, bfc_ref, o_ref, mid_ref = rest
    else:
        o_ref, mid_ref = rest
    hp, wp = oh + 2, ow + 2
    base = wp + 1
    length = n * hp * wp - 2 * base
    # conv1 (3x3 stride 2) from the pre-gathered tap stack
    acc1 = None
    for t in range(9):
        d = jnp.dot(t_ref[t], w1_ref[t], preferred_element_type=jnp.float32)
        acc1 = d if acc1 is None else acc1 + d
    h = jnp.maximum(acc1 + b1_ref[...], 0.0)                 # [n*oh*ow, CP]
    # scatter conv1 output into a zero-padded row-flattened VMEM intermediate
    mid_ref[...] = jnp.zeros_like(mid_ref)
    for i in range(n):
        for r in range(oh):
            src = (i * oh + r) * ow
            dst = i * hp * wp + (r + 1) * wp + 1
            mid_ref[dst:dst + ow, :] = h[src:src + ow, :]
    # conv2 (3x3 stride 1) + folded BN2
    acc2 = _conv3_shift(mid_ref, w2_ref, wp, length) + b2_ref[...]
    # projection shortcut: 1x1 stride-2 conv == centre tap of the s2 grid
    sc = jnp.dot(t_ref[4], wsc_ref[...], preferred_element_type=jnp.float32)
    sc = sc + bsc_ref[...]
    if with_head:
        inv_hw = 1.0 / float(oh * ow)
        for i in range(n):
            pool = None
            for r in range(oh):
                src = (i * oh + r) * ow
                dst = i * hp * wp + (r + 1) * wp + 1
                seg = jnp.maximum(
                    acc2[dst - base:dst - base + ow, :] + sc[src:src + ow, :],
                    0.0)
                s = jnp.sum(seg, axis=0, keepdims=True)
                pool = s if pool is None else pool + s
            pooled = (pool * inv_hw).astype(jnp.bfloat16)
            o_ref[i:i + 1, :] = (
                jnp.dot(pooled, wfc_ref[...],
                        preferred_element_type=jnp.float32) + bfc_ref[...])
    else:
        o_ref[...] = jnp.zeros_like(o_ref)
        for i in range(n):
            for r in range(oh):
                src = (i * oh + r) * ow
                dst = i * hp * wp + (r + 1) * wp + 1
                o_ref[dst:dst + ow, :] = jnp.maximum(
                    acc2[dst - base:dst - base + ow, :] + sc[src:src + ow, :],
                    0.0)


def _head_kernel(x_ref, wfc_ref, bfc_ref, o_ref, *, n, hp, wp, hw):
    # fallback head (only used if the last block is stride-1): avg-pool + FC
    inv = 1.0 / float(hw)
    for i in range(n):
        s = jnp.sum(x_ref[i * hp * wp:(i + 1) * hp * wp, :], axis=0,
                    keepdims=True) * inv
        o_ref[i:i + 1, :] = (
            jnp.dot(s.astype(jnp.bfloat16), wfc_ref[...],
                    preferred_element_type=jnp.float32) + bfc_ref[...])


# ------------------------------------------------------------------
# Wrappers (pallas_call plumbing + cheap XLA glue)
# ------------------------------------------------------------------

def _stem_patches(x_nhwc):
    # im2col for the stem only (IC=1, so this is ~1x the activation volume);
    # K padded to a multiple of 128 for the MXU.
    n, h, w, c = x_nhwc.shape
    xp = jnp.pad(x_nhwc, ((0, 0), (3, 3), (3, 3), (0, 0)))
    oh = (h + 6 - 7) // 2 + 1
    ow = (w + 6 - 7) // 2 + 1
    taps = [xp[:, i:i + 2 * oh:2, j:j + 2 * ow:2, :]
            for i in range(7) for j in range(7)]
    p = jnp.stack(taps, axis=3).reshape(n * oh * ow, 49 * c)
    p = _pad_axis(p, 1, _round_up(49 * c, 128)).astype(jnp.bfloat16)
    return p, (n, oh, ow)


def _stem_conv(patches, w, b):
    m, k = patches.shape
    tm = 256 if m % 256 == 0 else m
    return pl.pallas_call(
        _stem_kernel,
        out_shape=jax.ShapeDtypeStruct((m, CP), jnp.float32),
        grid=(m // tm,),
        in_specs=[pl.BlockSpec((tm, k), lambda i: (i, 0)),
                  pl.BlockSpec((k, CP), lambda i: (0, 0)),
                  pl.BlockSpec((1, CP), lambda i: (0, 0))],
        out_specs=pl.BlockSpec((tm, CP), lambda i: (i, 0)),
        compiler_params=_cp(grid_dims=1),
    )(patches, w, b)


def _maxpool_stem(y, n, oh, ow):
    # phase-decompose the (-inf padded) stem output so the kernel only needs
    # static slices; total HBM traffic ~1.3x the pooled input (no tap stack).
    x = y.reshape(n, oh, ow, CP)
    xp = jnp.pad(x, ((0, 0), (1, 1), (1, 1), (0, 0)),
                 constant_values=-jnp.inf)
    h2, w2 = (oh + 2) // 2, (ow + 2) // 2
    ph = xp.reshape(n, h2, 2, w2, 2, CP).transpose(2, 4, 0, 1, 3, 5)
    ph = ph.reshape(4 * n, h2, w2, CP)
    po, pw = oh // 2, ow // 2
    hp, wp = po + 2, pw + 2
    out = pl.pallas_call(
        functools.partial(_maxpool_kernel, n=n, po=po, pw=pw),
        out_shape=jax.ShapeDtypeStruct((n * hp * wp, CP), jnp.float32),
        in_specs=_vmem_specs(1),
        out_specs=pl.BlockSpec(memory_space=_VMEM),
        compiler_params=_cp(),
    )(ph)
    return out, (n, hp, wp)


def _interior_mask(n, hp, wp):
    idx = jnp.arange(n * hp * wp)
    h = (idx // wp) % hp
    w = idx % wp
    m = ((h >= 1) & (h <= hp - 2) & (w >= 1) & (w <= wp - 2)).astype(jnp.float32)
    base = wp + 1
    length = n * hp * wp - 2 * base
    return m[base:base + length].reshape(length, 1)


def _block_s1(act, bp, geom):
    n, hp, wp = geom
    rows = n * hp * wp
    mask = _interior_mask(n, hp, wp)
    return pl.pallas_call(
        functools.partial(_block_s1_kernel, n=n, hp=hp, wp=wp),
        out_shape=jax.ShapeDtypeStruct((rows, CP), jnp.float32),
        in_specs=_vmem_specs(6),
        out_specs=pl.BlockSpec(memory_space=_VMEM),
        scratch_shapes=[pltpu.VMEM((rows, CP), jnp.float32)],
        compiler_params=_cp(),
    )(act, bp['w1'], bp['b1'], bp['w2'], bp['b2'], mask)


def _block_down(act, bp, geom, head=None):
    n, hp, wp = geom
    oh, ow = (hp - 3) // 2 + 1, (wp - 3) // 2 + 1
    x4 = act.reshape(n, hp, wp, CP)
    taps = jnp.stack(
        [x4[:, di:di + 2 * oh:2, dj:dj + 2 * ow:2, :].reshape(n * oh * ow, CP)
         for di in range(3) for dj in range(3)], axis=0).astype(jnp.bfloat16)
    hp2, wp2 = oh + 2, ow + 2
    rows2 = n * hp2 * wp2
    with_head = head is not None
    args = [taps, bp['w1'], bp['b1'], bp['w2'], bp['b2'], bp['wsc'], bp['bsc']]
    if with_head:
        args += [head['wfc'], head['bfc']]
        out_shape = jax.ShapeDtypeStruct((n, head['bfc'].shape[1]), jnp.float32)
    else:
        out_shape = jax.ShapeDtypeStruct((rows2, CP), jnp.float32)
    out = pl.pallas_call(
        functools.partial(_block_down_kernel, n=n, oh=oh, ow=ow,
                          with_head=with_head),
        out_shape=out_shape,
        in_specs=_vmem_specs(len(args)),
        out_specs=pl.BlockSpec(memory_space=_VMEM),
        scratch_shapes=[pltpu.VMEM((rows2, CP), jnp.float32)],
        compiler_params=_cp(),
    )(*args)
    if with_head:
        return out
    return out, (n, hp2, wp2)


def _head(act, geom, hd):
    n, hp, wp = geom
    nc = hd['bfc'].shape[1]
    return pl.pallas_call(
        functools.partial(_head_kernel, n=n, hp=hp, wp=wp,
                          hw=(hp - 2) * (wp - 2)),
        out_shape=jax.ShapeDtypeStruct((n, nc), jnp.float32),
        in_specs=_vmem_specs(3),
        out_specs=pl.BlockSpec(memory_space=_VMEM),
        compiler_params=_cp(),
    )(act, hd['wfc'], hd['bfc'])


# ------------------------------------------------------------------
# Parameter construction (raw, deterministic) + one-time preparation
# (BN folding, transposition, channel/K padding, bf16 cast)
# ------------------------------------------------------------------

def _kaiming(key, shape, fan_in):
    return jax.random.normal(key, shape, jnp.float32) * jnp.sqrt(2.0 / fan_in)


def _bn_params(key, c, eps=1e-5):
    k1, k2, k3, k4 = jax.random.split(key, 4)
    gamma = 1.0 + 0.1 * jax.random.normal(k1, (c,), jnp.float32)
    beta = 0.1 * jax.random.normal(k2, (c,), jnp.float32)
    mean = 0.1 * jax.random.normal(k3, (c,), jnp.float32)
    var = jax.random.uniform(k4, (c,), jnp.float32, 0.5, 1.5)
    scale = gamma / jnp.sqrt(var + eps)
    bias = beta - mean * scale
    return scale, bias


def _make_block_params(key, in_planes, planes, stride):
    keys = jax.random.split(key, 6)
    p = {
        'stride': stride,
        'conv1_w': _kaiming(keys[0], (planes, in_planes, 3, 3), in_planes * 9),
        'bn1': _bn_params(keys[1], planes),
        'conv2_w': _kaiming(keys[2], (planes, planes, 3, 3), planes * 9),
        'bn2': _bn_params(keys[3], planes),
    }
    if stride != 1 or in_planes != planes:
        p['sc_w'] = _kaiming(keys[4], (planes, in_planes, 1, 1), in_planes)
        p['sc_bn'] = _bn_params(keys[5], planes)
    return p


def init_resnet_params(key, num_blocks=(1, 1, 1), num_classes=10):
    keys = jax.random.split(key, 7)
    params = {
        'conv1_w': _kaiming(keys[0], (32, 1, 7, 7), 1 * 7 * 7),
        'bn1': _bn_params(keys[1], 32),
    }
    in_planes = 32
    layers = []
    layer_keys = [keys[2], keys[3], keys[4]]
    for li, (planes, nb, stride) in enumerate(
            zip((32, 64, 128), num_blocks, (1, 2, 2))):
        blk_keys = jax.random.split(layer_keys[li], nb)
        strides = [stride] + [1] * (nb - 1)
        blocks = []
        for bk, s in zip(blk_keys, strides):
            blocks.append(_make_block_params(bk, in_planes, planes, s))
            in_planes = planes
        layers.append(blocks)
    params['layers'] = layers
    params['fc_w'] = _kaiming(keys[5], (num_classes, 128), 128)
    bound = 1.0 / jnp.sqrt(128.0)
    params['fc_b'] = jax.random.uniform(keys[6], (num_classes,), jnp.float32,
                                        -bound, bound)
    return params


def _prep_stem(w, scale, bias):
    oc, ic, kh, kw = w.shape
    k = kh * kw * ic
    w2 = jnp.transpose(w, (2, 3, 1, 0)).reshape(k, oc) * scale[None, :]
    w2 = _pad_axis(_pad_axis(w2, 0, _round_up(k, 128)), 1, CP)
    b = _pad_axis(bias, 0, CP).reshape(1, CP).astype(jnp.float32)
    return w2.astype(jnp.bfloat16), b


def _prep_conv3(w, scale, bias):
    oc, ic, kh, kw = w.shape
    w2 = jnp.transpose(w, (2, 3, 1, 0)).reshape(kh * kw, ic, oc)
    w2 = w2 * scale[None, None, :]
    w2 = _pad_axis(_pad_axis(w2, 1, CP), 2, CP).astype(jnp.bfloat16)
    b = _pad_axis(bias, 0, CP).reshape(1, CP).astype(jnp.float32)
    return w2, b


def _prep_conv1(w, scale, bias):
    oc, ic, _, _ = w.shape
    w2 = jnp.transpose(w, (2, 3, 1, 0)).reshape(ic, oc) * scale[None, :]
    w2 = _pad_axis(_pad_axis(w2, 0, CP), 1, CP).astype(jnp.bfloat16)
    b = _pad_axis(bias, 0, CP).reshape(1, CP).astype(jnp.float32)
    return w2, b


def _prep_head(w, b):
    wfc = _pad_axis(jnp.transpose(w), 0, CP).astype(jnp.bfloat16)
    bfc = b.reshape(1, -1).astype(jnp.float32)
    return {'wfc': wfc, 'bfc': bfc}


def prepare_params(params):
    prep = {}
    prep['stem_w'], prep['stem_b'] = _prep_stem(params['conv1_w'],
                                                *params['bn1'])
    layers = []
    for stage in params['layers']:
        blocks = []
        for p in stage:
            bp = {'stride': p['stride']}
            bp['w1'], bp['b1'] = _prep_conv3(p['conv1_w'], *p['bn1'])
            bp['w2'], bp['b2'] = _prep_conv3(p['conv2_w'], *p['bn2'])
            if 'sc_w' in p:
                bp['wsc'], bp['bsc'] = _prep_conv1(p['sc_w'], *p['sc_bn'])
            blocks.append(bp)
        layers.append(blocks)
    prep['layers'] = layers
    prep['head'] = _prep_head(params['fc_w'], params['fc_b'])
    return prep


# ------------------------------------------------------------------
# Forward pass
# ------------------------------------------------------------------

def resnet_forward(prep, x_nchw):
    x = jnp.transpose(x_nchw.astype(jnp.float32), (0, 2, 3, 1))  # NCHW -> NHWC
    # stem: conv7x7 s2 + folded BN + ReLU (gridded, parallel over rows)
    patches, (n, oh, ow) = _stem_patches(x)
    y = _stem_conv(patches, prep['stem_w'], prep['stem_b'])
    # maxpool 3x3 s2 -> zero-padded row-flattened activation layout
    act, geom = _maxpool_stem(y, n, oh, ow)
    # residual stages: one fused pallas_call per BasicBlock
    blocks = [bp for stage in prep['layers'] for bp in stage]
    for bi, bp in enumerate(blocks):
        last = bi == len(blocks) - 1
        if bp['stride'] == 1:
            act = _block_s1(act, bp, geom)
        else:
            if last:  # avg-pool + Linear head fused into the last block
                return _block_down(act, bp, geom, head=prep['head'])
            act, geom = _block_down(act, bp, geom)
    # last block was stride-1: run the small standalone head kernel
    return _head(act, geom, prep['head'])


if __name__ == "__main__":
    key = jax.random.PRNGKey(0)
    pkey, xkey = jax.random.split(key)
    params = init_resnet_params(pkey, num_blocks=(1, 1, 1), num_classes=10)
    prep = prepare_params(params)
    # input matches nn.Conv2d(1, 32, ...): single-channel 32x32 images, batch=2
    x = jax.random.normal(xkey, (2, 1, 32, 32), jnp.float32)
    out = resnet_forward(prep, x)
    out = jax.block_until_ready(out)
    assert out.shape == (2, 10) and out.dtype == jnp.float32
    print("KERNEL_OK")
</pallas_src>

<mosaic_0001>
module attributes {stable_mosaic.version = 11 : i64} {
  func.func @_stem_kernel(%arg0: i32, %arg1: memref<256x128xbf16, #tpu.memory_space<vmem>>, %arg2: memref<128x128xbf16, #tpu.memory_space<vmem>>, %arg3: memref<1x128xf32, #tpu.memory_space<vmem>>, %arg4: memref<256x128xf32, #tpu.memory_space<vmem>>) attributes {dimension_semantics = [#tpu.dimension_semantics<parallel>], iteration_bounds = array<i64: 2>, scalar_prefetch = 0 : i64, scratch_operands = 0 : i64, tpu.core_type = #tpu.core_type<tc>, window_params = [{transform_indices = @transform_0, window_bounds = array<i64: 256, 128>}, {pipeline_mode = #tpu.pipeline_mode<synchronous>, transform_indices = @transform_1, window_bounds = array<i64: 128, 128>}, {pipeline_mode = #tpu.pipeline_mode<synchronous>, transform_indices = @transform_2, window_bounds = array<i64: 1, 128>}, {transform_indices = @transform_3, window_bounds = array<i64: 256, 128>}]} {
    %c0 = arith.constant 0 : index
    %c0_0 = arith.constant 0 : index
    %0 = vector.load %arg1[%c0, %c0_0] : memref<256x128xbf16, #tpu.memory_space<vmem>>, vector<256x128xbf16>
    %c0_1 = arith.constant 0 : index
    %c0_2 = arith.constant 0 : index
    %1 = vector.load %arg2[%c0_1, %c0_2] : memref<128x128xbf16, #tpu.memory_space<vmem>>, vector<128x128xbf16>
    %cst = arith.constant dense<0.000000e+00> : vector<256x128xf32>
    %2 = tpu.matmul %0, %1, %cst {dimension_numbers = #tpu.dot_dimension_numbers<[1], [0], [0], [1], [0, 0, 1, 1], [], []>} : vector<256x128xbf16>, vector<128x128xbf16>, vector<256x128xf32> -> vector<256x128xf32>
    %c0_3 = arith.constant 0 : index
    %c0_4 = arith.constant 0 : index
    %3 = vector.load %arg3[%c0_3, %c0_4] : memref<1x128xf32, #tpu.memory_space<vmem>>, vector<1x128xf32>
    %4 = vector.broadcast %3 : vector<1x128xf32> to vector<256x128xf32>
    %5 = arith.addf %2, %4 : vector<256x128xf32>
    %cst_5 = arith.constant 0.000000e+00 : f32
    %6 = vector.broadcast %cst_5 : f32 to vector<256x128xf32>
    %7 = arith.maximumf %5, %6 : vector<256x128xf32>
    %c0_6 = arith.constant 0 : index
    %c0_7 = arith.constant 0 : index
    %8 = vector.load %arg4[%c0_6, %c0_7] : memref<256x128xf32, #tpu.memory_space<vmem>>, vector<256x128xf32>
    tpu.vector_store %arg4[%c0_6, %c0_7], %7 {strides = array<i32>} : memref<256x128xf32, #tpu.memory_space<vmem>>, vector<256x128xf32>,
    return
  }
  func.func @transform_0(%arg0: i32) -> (i32, i32) {
    %c0_i32 = arith.constant 0 : i32
    %c0_i32_0 = arith.constant 0 : i32
    return %arg0, %c0_i32 : i32, i32
  }
  func.func @transform_1(%arg0: i32) -> (i32, i32) {
    %c0_i32 = arith.constant 0 : i32
    %c0_i32_0 = arith.constant 0 : i32
    %c0_i32_1 = arith.constant 0 : i32
    return %c0_i32, %c0_i32_0 : i32, i32
  }
  func.func @transform_2(%arg0: i32) -> (i32, i32) {
    %c0_i32 = arith.constant 0 : i32
    %c0_i32_0 = arith.constant 0 : i32
    %c0_i32_1 = arith.constant 0 : i32
    return %c0_i32, %c0_i32_0 : i32, i32
  }
  func.func @transform_3(%arg0: i32) -> (i32, i32) {
    %c0_i32 = arith.constant 0 : i32
    %c0_i32_0 = arith.constant 0 : i32
    return %arg0, %c0_i32 : i32, i32
  }
}

</mosaic_0001>

<llo_original>
// kernel: tpu_custom_call.1
$region0: #{tpu_custom_call.1}
  #allocation0 [shape = 'u32[]', space=smem, size = 0x4, offset = 0x4, fixed_abs, tag = 'smem constant byte address 0x4 - core index']
  #allocation1 [shape = 'u32[72,128]{1,0:T(1,128)}', space=vmem, size = 0x9000, scoped, tag = 'internal scratch']
  %s0 = inlined_call_operand.hbm [shape: bf16[512,128], index: 0, kind: input, shape index: {}]
  %s1 = inlined_call_operand.hbm [shape: bf16[128,128], index: 1, kind: input, shape index: {}]
  %s2 = inlined_call_operand.vmem [shape: f32[1,128], index: 2, kind: input, shape index: {}]
  %s3 = inlined_call_operand.hbm [shape: f32[512,128], index: 3, kind: output, shape index: {}]
  %s4 = sld [smem:[#allocation0]]
  $region53: #{tpu_custom_call.1} parent=0
    _
  %s6 = ssub.s32 1, %s4
  %s7 = scalar_select 0, %s6, %s4
  $region1: #{tpu_custom_call.1} parent=0
    #allocation2 [shape = 'u8[131072]{0}', space=vmem, size = 0x20000, scoped, tag = 'input window, operand 0']
    #allocation3 [shape = 's32[2]{0}', space=sflag, size = 0x8, scoped, tag = 'scoped memory for tpu_custom_call.1']
    #allocation4 [shape = 's32[2]{0}', space=sflag, size = 0x8, scoped, tag = 'scoped memory for tpu_custom_call.1']
    #allocation5 [shape = 'u8[32768]{0}', space=vmem, size = 0x8000, scoped, tag = 'input window, operand 1, single buffered']
    #allocation6 [shape = 's32[1]{0}', space=sflag, size = 0x4, scoped, tag = 'scoped memory for tpu_custom_call.1']
    #allocation7 [shape = 'u8[262144]{0}', space=vmem, size = 0x40000, scoped, tag = 'output window, operand 0']
    %8 = vsyncpa [#allocation3], 0
    %s9 = scalar_lea.sflag [#allocation3], 1
    %10 = vsyncpa %s9, 0
    %11 = vsyncpa [#allocation6], 0
    %12 = vsyncpa [#allocation4], 0
    %s13 = scalar_lea.sflag [#allocation4], 1
    %14 = vsyncpa %s13, 0
    loop: start=0, step=1, limit=4
    $region2: #{tpu_custom_call.1} parent=1 // loop_pre_header
      _
    $region3: #{tpu_custom_call.1} parent=1 // loop_header
      %s16 = sphi 0, %s20
      %p17 = scmp.ge.s32.totalorder %s16, 4
      %s26 = sphi 0, %s28
      %s29 = sphi 0, %s26
      %s30 = sphi 0, %s29
      %s46 = sphi 0, %s30
      %s50 = sphi 0, %s50
      %s52 = sphi 0, %s50
      %s53 = sphi 0, %s52
      %s67 = sphi 0, %s53
      %s71 = sphi 0, %s71
      %s73 = sphi 0, %s71
      %s74 = sphi 0, %s73
      %s88 = sphi 0, %s74
      %s94 = sphi 0, %s96
      %s97 = sphi 0, %s94
      %s98 = sphi 0, %s97
      %s114 = sphi 0, %s98
    $region4: #{tpu_custom_call.1} parent=1 // loop_header_branch
      %19 = sbr.rel (%p17) target = $region8
    $region5: #{tpu_custom_call.1} parent=1 // loop_body
      %s21 = ssub.s32 %s16, 1
      %s22 = ssub.s32 %s16, 2
      %s23 = sadd.s32 %s16, 1
      %s24 = ssub.s32 %s16, %s23
      %p25 = scmp.eq.s32.totalorder %s24, 0
      %s27 = sadd.s32 %s26, 1
      %s28 = scalar_select %p25, %s26, %s27
      %p31 = pneg %p25
      %p32 = scmp.eq.s32.totalorder %s16, 1
      %p33 = por %p31, %p32
      %p34 = scmp.ne.s32.totalorder %s26, %s29
      %p35 = scmp.eq.s32.totalorder %s16, 0
      %p36 = por %p34, %p35
      %p37 = scmp.ne.s32.totalorder %s26, %s29
      %p38 = scmp.eq.s32.totalorder %s21, 1
      %p39 = por %p37, %p38
      %p40 = scmp.ne.s32.totalorder %s29, %s30
      %p41 = scmp.eq.s32.totalorder %s21, 0
      %p42 = por %p40, %p41
      %p43 = scmp.ne.s32.totalorder %s29, %s30
      %p44 = scmp.eq.s32.totalorder %s22, 1
      %p45 = por %p43, %p44
      %p47 = scmp.ne.s32.totalorder %s30, %s46
      %p48 = scmp.eq.s32.totalorder %s22, 0
      %p49 = por %p47, %p48
      %s51 = sadd.s32 %s50, 1
      %p54 = scmp.eq.s32.totalorder %s16, 1
      %p55 = scmp.ne.s32.totalorder %s50, %s52
      %p56 = scmp.eq.s32.totalorder %s16, 0
      %p57 = por %p55, %p56
      %p58 = scmp.ne.s32.totalorder %s50, %s52
      %p59 = scmp.eq.s32.totalorder %s21, 1
      %p60 = por %p58, %p59
      %p61 = scmp.ne.s32.totalorder %s52, %s53
      %p62 = scmp.eq.s32.totalorder %s21, 0
      %p63 = por %p61, %p62
      %p64 = scmp.ne.s32.totalorder %s52, %s53
      %p65 = scmp.eq.s32.totalorder %s22, 1
      %p66 = por %p64, %p65
      %p68 = scmp.ne.s32.totalorder %s53, %s67
      %p69 = scmp.eq.s32.totalorder %s22, 0
      %p70 = por %p68, %p69
      %s72 = sadd.s32 %s71, 1
      %p75 = scmp.eq.s32.totalorder %s16, 1
      %p76 = scmp.ne.s32.totalorder %s71, %s73
      %p77 = scmp.eq.s32.totalorder %s16, 0
      %p78 = por %p76, %p77
      %p79 = scmp.ne.s32.totalorder %s71, %s73
      %p80 = scmp.eq.s32.totalorder %s21, 1
      %p81 = por %p79, %p80
      %p82 = scmp.ne.s32.totalorder %s73, %s74
      %p83 = scmp.eq.s32.totalorder %s21, 0
      %p84 = por %p82, %p83
      %p85 = scmp.ne.s32.totalorder %s73, %s74
      %p86 = scmp.eq.s32.totalorder %s22, 1
      %p87 = por %p85, %p86
      %p89 = scmp.ne.s32.totalorder %s74, %s88
      %p90 = scmp.eq.s32.totalorder %s22, 0
      %p91 = por %p89, %p90
      %s92 = ssub.s32 %s16, %s23
      %p93 = scmp.eq.s32.totalorder %s92, 0
      %s95 = sadd.s32 %s94, 1
      %s96 = scalar_select %p93, %s94, %s95
      %p99 = pneg %p93
      %p100 = scmp.eq.s32.totalorder %s16, 1
      %p101 = por %p99, %p100
      %p102 = scmp.ne.s32.totalorder %s94, %s97
      %p103 = scmp.eq.s32.totalorder %s16, 0
      %p104 = por %p102, %p103
      %p105 = scmp.ne.s32.totalorder %s94, %s97
      %p106 = scmp.eq.s32.totalorder %s21, 1
      %p107 = por %p105, %p106
      %p108 = scmp.ne.s32.totalorder %s97, %s98
      %p109 = scmp.eq.s32.totalorder %s21, 0
      %p110 = por %p108, %p109
      %p111 = scmp.ne.s32.totalorder %s97, %s98
      %p112 = scmp.eq.s32.totalorder %s22, 1
      %p113 = por %p111, %p112
      %p115 = scmp.ne.s32.totalorder %s98, %s114
      %p116 = scmp.eq.s32.totalorder %s22, 0
      %p117 = por %p115, %p116
      %p118 = scmp.le.s32.totalorder 1, %s16
      %p119 = scmp.lt.s32.totalorder %s16, 3
      %p120 = pnand %p118, %p119
      %p121 = pneg %p120
      // Predicated region
      $region9: #{tpu_custom_call.1} parent=5 // pred_check
        _
      $region10: #{tpu_custom_call.1} parent=5 // pred_check_branch
        %123 = sbr.rel (%p120) target = $region12
      $region11: #{tpu_custom_call.1} parent=5 // pred_region
        %s124 = ssub.s32 %s16, 1
        // Predicated region
        $region13: #{tpu_custom_call.1} parent=11 // pred_check
          %p125 = pneg %p63
        $region14: #{tpu_custom_call.1} parent=11 // pred_check_branch
          %127 = sbr.rel (%p125) target = $region16
        $region15: #{tpu_custom_call.1} parent=11 // pred_region
          %129 = vsyncadd [#allocation6], 0
          %s130 = sshll.u32 %s1, 4
          %s131 = int_to_ptr.hbm [resolvable:$true] %s130
          %s132 = sshll.u32 [#allocation5], 4
          %s133 = int_to_ptr.vmem [resolvable:$true] %s132
          %138 = dma.hbm_to_vmem [thread:$0]  %s131, 1024, %s133, [#allocation6], 64, 64, 4
        $region16: #{tpu_custom_call.1} parent=11 // pred_fallthru
          _
        // Predicated region
        $region17: #{tpu_custom_call.1} parent=11 // pred_check
          %p139 = pneg %p84
        $region18: #{tpu_custom_call.1} parent=11 // pred_check_branch
          %141 = sbr.rel (%p139) target = $region20
        $region19: #{tpu_custom_call.1} parent=11 // pred_region
          _
        $region20: #{tpu_custom_call.1} parent=11 // pred_fallthru
          _
      $region12: #{tpu_custom_call.1} parent=5 // pred_fallthru
        _
      %p142 = scmp.lt.s32.totalorder %s16, 2
      // Predicated region
      $region21: #{tpu_custom_call.1} parent=5 // pred_check
        %p143 = pneg %p142
      $region22: #{tpu_custom_call.1} parent=5 // pred_check_branch
        %145 = sbr.rel (%p143) target = $region24
      $region23: #{tpu_custom_call.1} parent=5 // pred_region
        // Predicated region
        $region25: #{tpu_custom_call.1} parent=23 // pred_check
          %p146 = pneg %p36
        $region26: #{tpu_custom_call.1} parent=23 // pred_check_branch
          %148 = sbr.rel (%p146) target = $region28
        $region27: #{tpu_custom_call.1} parent=23 // pred_region
          %s149 = sand.u32 %s26, 1
          %s150 = scalar_lea.sflag [#allocation3], %s149
          %s151 = sand.u32 %s26, 1
          %s152 = smul.addr %s151, 128
          %s153 = scalar_lea.vmem [#allocation2], %s152
          %s154 = smul.u32 32, %s16
          %156 = vsyncadd %s150, 0
          %s157 = smul.addr %s154, 4
          %s158 = scalar_lea.hbm %s0, %s157
          %s159 = sshll.u32 %s158, 4
          %s160 = int_to_ptr.hbm [resolvable:$true] %s159
          %s161 = sshll.u32 %s153, 4
          %s162 = int_to_ptr.vmem [resolvable:$true] %s161
          %167 = dma.hbm_to_vmem [thread:$0]  %s160, 2048, %s162, %s150, 64, 64, 4
        $region28: #{tpu_custom_call.1} parent=23 // pred_fallthru
          _
      $region24: #{tpu_custom_call.1} parent=5 // pred_fallthru
        _
      %p168 = scmp.le.s32.totalorder 1, %s16
      %p169 = scmp.lt.s32.totalorder %s16, 3
      %p170 = pnand %p168, %p169
      %p171 = pneg %p170
      // Predicated region
      $region29: #{tpu_custom_call.1} parent=5 // pred_check
        _
      $region30: #{tpu_custom_call.1} parent=5 // pred_check_branch
        %173 = sbr.rel (%p170) target = $region32
      $region31: #{tpu_custom_call.1} parent=5 // pred_region
        %s174 = ssub.s32 %s16, 1
        %s175 = sand.u32 %s29, 1
        %s176 = scalar_lea.sflag [#allocation3], %s175
        %s177 = sand.u32 %s29, 1
        %s178 = smul.addr %s177, 128
        %s179 = scalar_lea.vmem [#allocation2], %s178
        // Predicated region
        $region33: #{tpu_custom_call.1} parent=31 // pred_check
          %p180 = pneg %p42
        $region34: #{tpu_custom_call.1} parent=31 // pred_check_branch
          %182 = sbr.rel (%p180) target = $region36
        $region35: #{tpu_custom_call.1} parent=31 // pred_region
          %184 = dma.done %s176, 2048
        $region36: #{tpu_custom_call.1} parent=31 // pred_fallthru
          _
        // Predicated region
        $region37: #{tpu_custom_call.1} parent=31 // pred_check
          %p185 = pneg %p63
        $region38: #{tpu_custom_call.1} parent=31 // pred_check_branch
          %187 = sbr.rel (%p185) target = $region40
        $region39: #{tpu_custom_call.1} parent=31 // pred_region
          %189 = dma.done [#allocation6], 1024
        $region40: #{tpu_custom_call.1} parent=31 // pred_fallthru
          _
        %s190 = sand.u32 %s29, 1
        %s191 = scalar_lea.sflag [#allocation3], %s190
        %s192 = sand.u32 %s29, 1
        %s193 = smul.addr %s192, 128
        %s194 = scalar_lea.vmem [#allocation2], %s193
        %p195 = pneg %p42
        %p196 = pneg %p39
        %p197 = pneg %p63
        %p198 = pneg %p60
        %p199 = pneg %p84
        %p200 = pneg %p81
        %p201 = pneg %p110
        %p202 = pneg %p107
        %s203 = sand.u32 %s97, 1
        %s204 = scalar_lea.sflag [#allocation4], %s203
        %s205 = sand.u32 %s97, 1
        %s206 = smul.addr %s205, 256
        %s207 = scalar_lea.vmem [#allocation7], %s206
        %s208 = smul.u32 32, %s21
        %s209 = smul.u32 32, %s21
        %v210 = vld [vmem:[%s179] sm:$0xf]
        %v211 = vld [vmem:[%s179 + $0x4] sm:$0xf]
        %v212 = vld [vmem:[%s179 + $0x8] sm:$0xf]
        %v213 = vld [vmem:[%s179 + $0xc] sm:$0xf]
        %v214 = vld [vmem:[%s179 + $0x10] sm:$0xf]
        %v215 = vld [vmem:[%s179 + $0x14] sm:$0xf]
        %v216 = vld [vmem:[%s179 + $0x18] sm:$0xf]
        %v217 = vld [vmem:[%s179 + $0x1c] sm:$0xf]
        %v218 = vld [vmem:[%s179 + $0x20] sm:$0xf]
        %v219 = vld [vmem:[%s179 + $0x24] sm:$0xf]
        %v220 = vld [vmem:[%s179 + $0x28] sm:$0xf]
        %v221 = vld [vmem:[%s179 + $0x2c] sm:$0xf]
        %v222 = vld [vmem:[%s179 + $0x30] sm:$0xf]
        %v223 = vld [vmem:[%s179 + $0x34] sm:$0xf]
        %v224 = vld [vmem:[%s179 + $0x38] sm:$0xf]
        %v225 = vld [vmem:[%s179 + $0x3c] sm:$0xf]
        %v226 = vld [vmem:[%s179 + $0x40] sm:$0xf]
        %v227 = vld [vmem:[%s179 + $0x44] sm:$0xf]
        %v228 = vld [vmem:[%s179 + $0x48] sm:$0xf]
        %v229 = vld [vmem:[%s179 + $0x4c] sm:$0xf]
        %v230 = vld [vmem:[%s179 + $0x50] sm:$0xf]
        %v231 = vld [vmem:[%s179 + $0x54] sm:$0xf]
        %v232 = vld [vmem:[%s179 + $0x58] sm:$0xf]
        %v233 = vld [vmem:[%s179 + $0x5c] sm:$0xf]
        %v234 = vld [vmem:[%s179 + $0x60] sm:$0xf]
        %v235 = vld [vmem:[%s179 + $0x64] sm:$0xf]
        %v236 = vld [vmem:[%s179 + $0x68] sm:$0xf]
        %v237 = vld [vmem:[%s179 + $0x6c] sm:$0xf]
        %v238 = vld [vmem:[%s179 + $0x70] sm:$0xf]
        %v239 = vld [vmem:[%s179 + $0x74] sm:$0xf]
        %v240 = vld [vmem:[%s179 + $0x78] sm:$0xf]
        %v241 = vld [vmem:[%s179 + $0x7c] sm:$0xf]
        %v242 = vld [vmem:[#allocation5] sm:$0xf]
        %v243 = vld [vmem:[#allocation5 + $0x4] sm:$0xf]
        %v244 = vld [vmem:[#allocation5 + $0x8] sm:$0xf]
        %v245 = vld [vmem:[#allocation5 + $0xc] sm:$0xf]
        %v246 = vld [vmem:[#allocation5 + $0x10] sm:$0xf]
        %v247 = vld [vmem:[#allocation5 + $0x14] sm:$0xf]
        %v248 = vld [vmem:[#allocation5 + $0x18] sm:$0xf]
        %v249 = vld [vmem:[#allocation5 + $0x1c] sm:$0xf]
        %v250 = vld [vmem:[#allocation5 + $0x20] sm:$0xf]
        %v251 = vld [vmem:[#allocation5 + $0x24] sm:$0xf]
        %v252 = vld [vmem:[#allocation5 + $0x28] sm:$0xf]
        %v253 = vld [vmem:[#allocation5 + $0x2c] sm:$0xf]
        %v254 = vld [vmem:[#allocation5 + $0x30] sm:$0xf]
        %v255 = vld [vmem:[#allocation5 + $0x34] sm:$0xf]
        %v256 = vld [vmem:[#allocation5 + $0x38] sm:$0xf]
        %v257 = vld [vmem:[#allocation5 + $0x3c] sm:$0xf]
        %v258 = vld [vmem:[%s2] sm:$0x1]
        %v260 = vperm.slane %v258, 0
        %v294 = vunpack.c.l.b16 %v210
        %v295 = vunpack.c.l.b16 %v211
        %v296 = vunpack.c.l.b16 %v212
        %v297 = vunpack.c.l.b16 %v213
        %v298 = vunpack.c.l.b16 %v214
        %v299 = vunpack.c.l.b16 %v215
        %v300 = vunpack.c.l.b16 %v216
        %v301 = vunpack.c.l.b16 %v217
        %v302 = vunpack.c.l.b16 %v218
        %v303 = vunpack.c.l.b16 %v219
        %v304 = vunpack.c.l.b16 %v220
        %v305 = vunpack.c.l.b16 %v221
        %v306 = vunpack.c.l.b16 %v222
        %v307 = vunpack.c.l.b16 %v223
        %v308 = vunpack.c.l.b16 %v224
        %v309 = vunpack.c.l.b16 %v225
        %v310 = vunpack.c.l.b16 %v226
        %v311 = vunpack.c.l.b16 %v227
        %v312 = vunpack.c.l.b16 %v228
        %v313 = vunpack.c.l.b16 %v229
        %v314 = vunpack.c.l.b16 %v230
        %v315 = vunpack.c.l.b16 %v231
        %v316 = vunpack.c.l.b16 %v232
        %v317 = vunpack.c.l.b16 %v233
        %v318 = vunpack.c.l.b16 %v234
        %v319 = vunpack.c.l.b16 %v235
        %v320 = vunpack.c.l.b16 %v236
        %v321 = vunpack.c.l.b16 %v237
        %v322 = vunpack.c.l.b16 %v238
        %v323 = vunpack.c.l.b16 %v239
        %v324 = vunpack.c.l.b16 %v240
        %v325 = vunpack.c.l.b16 %v241
        %v326 = vpack.c.b16 %v295, %v294
        %v327 = vpack.c.b16 %v297, %v296
        %v328 = vpack.c.b16 %v299, %v298
        %v329 = vpack.c.b16 %v301, %v300
        %v330 = vpack.c.b16 %v303, %v302
        %v331 = vpack.c.b16 %v305, %v304
        %v332 = vpack.c.b16 %v307, %v306
        %v333 = vpack.c.b16 %v309, %v308
        %v334 = vpack.c.b16 %v311, %v310
        %v335 = vpack.c.b16 %v313, %v312
        %v336 = vpack.c.b16 %v315, %v314
        %v337 = vpack.c.b16 %v317, %v316
        %v338 = vpack.c.b16 %v319, %v318
        %v339 = vpack.c.b16 %v321, %v320
        %v340 = vpack.c.b16 %v323, %v322
        %v341 = vpack.c.b16 %v325, %v324
        %v374 = vunpack.c.l.b16 %v242
        %v375 = vunpack.c.l.b16 %v243
        %v376 = vunpack.c.l.b16 %v244
        %v377 = vunpack.c.l.b16 %v245
        %v378 = vunpack.c.l.b16 %v246
        %v379 = vunpack.c.l.b16 %v247
        %v380 = vunpack.c.l.b16 %v248
        %v381 = vunpack.c.l.b16 %v249
        %v382 = vunpack.c.l.b16 %v250
        %v383 = vunpack.c.l.b16 %v251
        %v384 = vunpack.c.l.b16 %v252
        %v385 = vunpack.c.l.b16 %v253
        %v386 = vunpack.c.l.b16 %v254
        %v387 = vunpack.c.l.b16 %v255
        %v388 = vunpack.c.l.b16 %v256
        %v389 = vunpack.c.l.b16 %v257
        %v390 = vpack.c.b16 %v375, %v374
        %v391 = vpack.c.b16 %v377, %v376
        %v392 = vpack.c.b16 %v379, %v378
        %v393 = vpack.c.b16 %v381, %v380
        %v394 = vpack.c.b16 %v383, %v382
        %v395 = vpack.c.b16 %v385, %v384
        %v396 = vpack.c.b16 %v387, %v386
        %v397 = vpack.c.b16 %v389, %v388
        %406 = vmatpush.bf16.msra.mxu0 %v397
        %407 = vmatpush.bf16.msra.mxu0 %v396
        %408 = vmatpush.bf16.msra.mxu0 %v395
        %409 = vmatpush.bf16.msra.mxu0 %v394
        %410 = vmatpush.bf16.msra.mxu0 %v393
        %411 = vmatpush.bf16.msra.mxu0 %v392
        %412 = vmatpush.bf16.msra.mxu0 %v391
        %413 = vmatpush.bf16.msra.mxu0 %v390
        %414 = vmatmul.bf16.gmra.mxu0 %v326
        %v415 = vpop.f32.mrf.mxu0
        %v416 = vadd.f32 %v260, %v415
        %v417 = vpop.f32.mrf.mxu0
        %v418 = vadd.f32 %v260, %v417
        %419 = vmatmul.bf16.gmra.mxu0 %v327
        %v420 = vpop.f32.mrf.mxu0
        %v421 = vadd.f32 %v260, %v420
        %v422 = vpop.f32.mrf.mxu0
        %v423 = vadd.f32 %v260, %v422
        %424 = vmatmul.bf16.gmra.mxu0 %v328
        %v425 = vpop.f32.mrf.mxu0
        %v426 = vadd.f32 %v260, %v425
        %v427 = vpop.f32.mrf.mxu0
        %v428 = vadd.f32 %v260, %v427
        %429 = vmatmul.bf16.gmra.mxu0 %v329
        %v430 = vpop.f32.mrf.mxu0
        %v431 = vadd.f32 %v260, %v430
        %v432 = vpop.f32.mrf.mxu0
        %v433 = vadd.f32 %v260, %v432
        %434 = vmatmul.bf16.gmra.mxu0 %v330
        %v435 = vpop.f32.mrf.mxu0
        %v436 = vadd.f32 %v260, %v435
        %v437 = vpop.f32.mrf.mxu0
        %v438 = vadd.f32 %v260, %v437
        %439 = vmatmul.bf16.gmra.mxu0 %v331
        %v440 = vpop.f32.mrf.mxu0
        %v441 = vadd.f32 %v260, %v440
        %v442 = vpop.f32.mrf.mxu0
        %v443 = vadd.f32 %v260, %v442
        %444 = vmatmul.bf16.gmra.mxu0 %v332
        %v445 = vpop.f32.mrf.mxu0
        %v446 = vadd.f32 %v260, %v445
        %v447 = vpop.f32.mrf.mxu0
        %v448 = vadd.f32 %v260, %v447
        %449 = vmatmul.bf16.gmra.mxu0 %v333
        %v450 = vpop.f32.mrf.mxu0
        %v451 = vadd.f32 %v260, %v450
        %v452 = vpop.f32.mrf.mxu0
        %v453 = vadd.f32 %v260, %v452
        %454 = vmatmul.bf16.gmra.mxu0 %v334
        %v455 = vpop.f32.mrf.mxu0
        %v456 = vadd.f32 %v260, %v455
        %v457 = vpop.f32.mrf.mxu0
        %v458 = vadd.f32 %v260, %v457
        %459 = vmatmul.bf16.gmra.mxu0 %v335
        %v460 = vpop.f32.mrf.mxu0
        %v461 = vadd.f32 %v260, %v460
        %v462 = vpop.f32.mrf.mxu0
        %v463 = vadd.f32 %v260, %v462
        %464 = vmatmul.bf16.gmra.mxu0 %v336
        %v465 = vpop.f32.mrf.mxu0
        %v466 = vadd.f32 %v260, %v465
        %v467 = vpop.f32.mrf.mxu0
        %v468 = vadd.f32 %v260, %v467
        %469 = vmatmul.bf16.gmra.mxu0 %v337
        %v470 = vpop.f32.mrf.mxu0
        %v471 = vadd.f32 %v260, %v470
        %v472 = vpop.f32.mrf.mxu0
        %v473 = vadd.f32 %v260, %v472
        %474 = vmatmul.bf16.gmra.mxu0 %v338
        %v475 = vpop.f32.mrf.mxu0
        %v476 = vadd.f32 %v260, %v475
        %v477 = vpop.f32.mrf.mxu0
        %v478 = vadd.f32 %v260, %v477
        %479 = vmatmul.bf16.gmra.mxu0 %v339
        %v480 = vpop.f32.mrf.mxu0
        %v481 = vadd.f32 %v260, %v480
        %v482 = vpop.f32.mrf.mxu0
        %v483 = vadd.f32 %v260, %v482
        %484 = vmatmul.bf16.gmra.mxu0 %v340
        %v485 = vpop.f32.mrf.mxu0
        %v486 = vadd.f32 %v260, %v485
        %v487 = vpop.f32.mrf.mxu0
        %v488 = vadd.f32 %v260, %v487
        %489 = vmatmul.bf16.gmra.mxu0 %v341
        %v490 = vpop.f32.mrf.mxu0
        %v491 = vadd.f32 %v260, %v490
        %v492 = vpop.f32.mrf.mxu0
        %v493 = vadd.f32 %v260, %v492
        %494 = vdwg.mxu0
        %v495 = vmax.f32 %v416, 0.0
        %v496 = vmax.f32 %v418, 0.0
        %v497 = vmax.f32 %v421, 0.0
        %v498 = vmax.f32 %v423, 0.0
        %v499 = vmax.f32 %v426, 0.0
        %v500 = vmax.f32 %v428, 0.0
        %v501 = vmax.f32 %v431, 0.0
        %v502 = vmax.f32 %v433, 0.0
        %v503 = vmax.f32 %v436, 0.0
        %v504 = vmax.f32 %v438, 0.0
        %v505 = vmax.f32 %v441, 0.0
        %v506 = vmax.f32 %v443, 0.0
        %v507 = vmax.f32 %v446, 0.0
        %v508 = vmax.f32 %v448, 0.0
        %v509 = vmax.f32 %v451, 0.0
        %v510 = vmax.f32 %v453, 0.0
        %v511 = vmax.f32 %v456, 0.0
        %v512 = vmax.f32 %v458, 0.0
        %v513 = vmax.f32 %v461, 0.0
        %v514 = vmax.f32 %v463, 0.0
        %v515 = vmax.f32 %v466, 0.0
        %v516 = vmax.f32 %v468, 0.0
        %v517 = vmax.f32 %v471, 0.0
        %v518 = vmax.f32 %v473, 0.0
        %v519 = vmax.f32 %v476, 0.0
        %v520 = vmax.f32 %v478, 0.0
        %v521 = vmax.f32 %v481, 0.0
        %v522 = vmax.f32 %v483, 0.0
        %v523 = vmax.f32 %v486, 0.0
        %v524 = vmax.f32 %v488, 0.0
        %v525 = vmax.f32 %v491, 0.0
        %v526 = vmax.f32 %v493, 0.0
        %527 = vst [vmem:[%s207] sm:$0xff] %v495
        %528 = vst [vmem:[%s207 + $0x8] sm:$0xff] %v496
        %529 = vst [vmem:[%s207 + $0x10] sm:$0xff] %v497
        %530 = vst [vmem:[%s207 + $0x18] sm:$0xff] %v498
        %531 = vst [vmem:[%s207 + $0x20] sm:$0xff] %v499
        %532 = vst [vmem:[%s207 + $0x28] sm:$0xff] %v500
        %533 = vst [vmem:[%s207 + $0x30] sm:$0xff] %v501
        %534 = vst [vmem:[%s207 + $0x38] sm:$0xff] %v502
        %535 = vst [vmem:[%s207 + $0x40] sm:$0xff] %v503
        %536 = vst [vmem:[%s207 + $0x48] sm:$0xff] %v504
        %537 = vst [vmem:[%s207 + $0x50] sm:$0xff] %v505
        %538 = vst [vmem:[%s207 + $0x58] sm:$0xff] %v506
        %539 = vst [vmem:[%s207 + $0x60] sm:$0xff] %v507
        %540 = vst [vmem:[%s207 + $0x68] sm:$0xff] %v508
        %541 = vst [vmem:[%s207 + $0x70] sm:$0xff] %v509
        %542 = vst [vmem:[%s207 + $0x78] sm:$0xff] %v510
        %543 = vst [vmem:[%s207 + $0x80] sm:$0xff] %v511
        %544 = vst [vmem:[%s207 + $0x88] sm:$0xff] %v512
        %545 = vst [vmem:[%s207 + $0x90] sm:$0xff] %v513
        %546 = vst [vmem:[%s207 + $0x98] sm:$0xff] %v514
        %547 = vst [vmem:[%s207 + $0xa0] sm:$0xff] %v515
        %548 = vst [vmem:[%s207 + $0xa8] sm:$0xff] %v516
        %549 = vst [vmem:[%s207 + $0xb0] sm:$0xff] %v517
        %550 = vst [vmem:[%s207 + $0xb8] sm:$0xff] %v518
        %551 = vst [vmem:[%s207 + $0xc0] sm:$0xff] %v519
        %552 = vst [vmem:[%s207 + $0xc8] sm:$0xff] %v520
        %553 = vst [vmem:[%s207 + $0xd0] sm:$0xff] %v521
        %554 = vst [vmem:[%s207 + $0xd8] sm:$0xff] %v522
        %555 = vst [vmem:[%s207 + $0xe0] sm:$0xff] %v523
        %556 = vst [vmem:[%s207 + $0xe8] sm:$0xff] %v524
        %557 = vst [vmem:[%s207 + $0xf0] sm:$0xff] %v525
        %558 = vst [vmem:[%s207 + $0xf8] sm:$0xff] %v526
        %s559 = sand.u32 %s97, 1
        %s560 = scalar_lea.sflag [#allocation4], %s559
        %s561 = sand.u32 %s97, 1
        %s562 = smul.addr %s561, 256
        %s563 = scalar_lea.vmem [#allocation7], %s562
        // Predicated region
        $region41: #{tpu_custom_call.1} parent=31 // pred_check
          %p564 = pneg %p107
        $region42: #{tpu_custom_call.1} parent=31 // pred_check_branch
          %566 = sbr.rel (%p564) target = $region44
        $region43: #{tpu_custom_call.1} parent=31 // pred_region
          %s567 = smul.u32 32, %s21
          %569 = vsyncadd %s560, 0
          %s570 = smul.addr %s567, 8
          %s571 = scalar_lea.hbm %s3, %s570
          %s572 = sshll.u32 %s563, 4
          %s573 = int_to_ptr.vmem [resolvable:$true] %s572
          %s574 = sshll.u32 %s571, 4
          %s575 = int_to_ptr.hbm [resolvable:$true] %s574
          %580 = dma.vmem_to_hbm [thread:$0]  %s573, 4096, %s575, %s560, 128, 128, 8
        $region44: #{tpu_custom_call.1} parent=31 // pred_fallthru
          _
      $region32: #{tpu_custom_call.1} parent=5 // pred_fallthru
        _
      %p581 = scmp.le.s32.totalorder 2, %s16
      // Predicated region
      $region45: #{tpu_custom_call.1} parent=5 // pred_check
        %p582 = pneg %p581
      $region46: #{tpu_custom_call.1} parent=5 // pred_check_branch
        %584 = sbr.rel (%p582) target = $region48
      $region47: #{tpu_custom_call.1} parent=5 // pred_region
        %s585 = ssub.s32 %s16, 2
        // Predicated region
        $region49: #{tpu_custom_call.1} parent=47 // pred_check
          %p586 = pneg %p113
        $region50: #{tpu_custom_call.1} parent=47 // pred_check_branch
          %588 = sbr.rel (%p586) target = $region52
        $region51: #{tpu_custom_call.1} parent=47 // pred_region
          %s589 = sand.u32 %s98, 1
          %s590 = scalar_lea.sflag [#allocation4], %s589
          %s591 = sand.u32 %s98, 1
          %s592 = smul.addr %s591, 256
          %s593 = scalar_lea.vmem [#allocation7], %s592
          %595 = dma.done %s590, 4096
        $region52: #{tpu_custom_call.1} parent=47 // pred_fallthru
          _
      $region48: #{tpu_custom_call.1} parent=5 // pred_fallthru
        _
    $region6: #{tpu_custom_call.1} parent=1 // loop_footer
      %s20 = sadd.s32 1, %s16
    $region7: #{tpu_custom_call.1} parent=1 // loop_footer_branch
      %15 = sbr.rel target = $region3
    $region8: #{tpu_custom_call.1} parent=1 // loop_exit
      _
    %596 = vsyncpa [#allocation3], 1
    %s597 = scalar_lea.sflag [#allocation3], 1
    %598 = vsyncpa %s597, 1
    %599 = vsyncpa [#allocation6], 1
    %600 = vsyncpa [#allocation4], 1
    %s601 = scalar_lea.sflag [#allocation4], 1
    %602 = vsyncpa %s601, 1

</llo_original>
